<compile_context>
chip_gen: v7x
topology: tpu7x:2x2x1
jax: 0.10.0
libtpu: 0.0.40
codegen_flags: <defaults>
</compile_context>

<pallas_src>
import functools

import numpy as np
import jax
import jax.numpy as jnp
from jax.experimental import pallas as pl
from jax.experimental.pallas import tpu as pltpu


_GROUP = 8                # 2x2x2 max-pool window size
_LANES = 128              # TPU lane width
_GPR = _LANES // _GROUP   # pooled outputs per 128-lane row (16)


# --------------------- Hilbert curve utilities (host-side, deterministic) ----
def _hilbert_d_to_xyz(d, order, ndim=3):
    """Skilling transpose-to-axes: Hilbert distance d -> coords, cube side 2**order."""
    X = [0] * ndim
    for i in range(order * ndim):
        bit = (d >> (order * ndim - 1 - i)) & 1
        X[i % ndim] |= bit << (order - 1 - i // ndim)
    N = 2 << (order - 1)
    t = X[ndim - 1] >> 1
    for i in range(ndim - 1, 0, -1):
        X[i] ^= X[i - 1]
    X[0] ^= t
    Q = 2
    while Q != N:
        P = Q - 1
        for i in range(ndim - 1, -1, -1):
            if X[i] & Q:
                X[0] ^= P
            else:
                t = (X[0] ^ X[i]) & P
                X[0] ^= t
                X[i] ^= t
        Q <<= 1
    return X


def hilbert_coordinates(order):
    """(n**3, 3) coordinates along the 3D Hilbert curve, n = 2**order."""
    n = 1 << order
    return np.array([_hilbert_d_to_xyz(d, order) for d in range(n ** 3)],
                    dtype=np.int32)


def hilbert_distances(order):
    """(n, n, n) array: distance[i,j,k] = Hilbert distance of voxel (i,j,k)."""
    n = 1 << order
    coords = hilbert_coordinates(order)
    dist = np.zeros((n, n, n), dtype=np.int32)
    dist[coords[:, 0], coords[:, 1], coords[:, 2]] = np.arange(n ** 3, dtype=np.int32)
    return dist


def build_gather_index(distance, coordinate, W):
    """Fused (2d->3d scatter) + (2x2x2 window) + (3d->2d gather) index, (8, M)."""
    offs = np.array([(a, b, c) for a in (0, 1) for b in (0, 1) for c in (0, 1)],
                    dtype=np.int32)                       # (8, 3)
    base = 2 * coordinate                                  # (M, 3)
    pts = base[None, :, :] + offs[:, None, :]              # (8, M, 3)
    idx = distance[pts[..., 0], pts[..., 1], pts[..., 2]]  # (8, M)
    return idx.astype(np.int32)


# --------------------------- plan building (host side) -----------------------
def _probe_roll_result_offset():
    """Probe pltpu.roll's shift direction once on-device; return the lane offset
    (within each 8-lane group) where the shift-max tree leaves the group max."""
    def probe_kernel(x_ref, o_ref):
        o_ref[...] = pltpu.roll(x_ref[...], 1, axis=1)

    x = jnp.arange(_LANES, dtype=jnp.float32).reshape(1, _LANES)
    y = pl.pallas_call(
        probe_kernel,
        out_shape=jax.ShapeDtypeStruct((1, _LANES), jnp.float32),
    )(x)
    y = np.asarray(jax.block_until_ready(y))
    if y[0, 1] == 0.0:      # roll(x, s)[l] == x[l - s]  (jnp.roll convention)
        return _GROUP - 1
    if y[0, 1] == 2.0:      # roll(x, s)[l] == x[l + s]
        return 0
    raise AssertionError(f"unexpected pltpu.roll semantics: {y[0, :4]}")


def build_pool_plan(distance, coordinate, W):
    """Decide between the gather-free grouped path and the gather fallback."""
    gather_idx = build_gather_index(distance, coordinate, W)    # (8, M)
    M = gather_idx.shape[1]
    srt = np.sort(gather_idx, axis=0)
    base = srt[0]
    contiguous_runs = (
        np.all(base % _GROUP == 0)
        and np.array_equal(srt, base[None, :]
                           + np.arange(_GROUP, dtype=srt.dtype)[:, None]))
    plan = {"mode": "gather", "gather_idx": gather_idx, "perm": None, "offset": None}
    if not contiguous_runs:
        return plan
    perm = (base // _GROUP).astype(np.int32)
    plan["mode"] = "grouped"
    if not np.array_equal(perm, np.arange(M, dtype=np.int32)):
        plan["perm"] = perm
    if (W ** 3) % _LANES == 0:
        plan["offset"] = _probe_roll_result_offset()
    return plan


# ------------------------------------ Pallas kernels -------------------------
def _hp_pool_kernel(sel_ref, x_ref, o_ref, *, result_lane_offset):
    """Grouped 8-lane max pool of lane-dense rows.

    sel_ref: (128, 16) VMEM-resident 0/1 selection matrix (constant block).
    x_ref:   (T, 128)  -- 16 aligned groups of 8 taps per row.
    o_ref:   (T, 16)   -- one pooled value per group.
    """
    x = x_ref[...]
    # Shift-max tree within each 128-lane row.  Rolls run on the XLU, maxima on
    # the VPU; wraparound only touches lanes whose results are never selected.
    m = jnp.maximum(x, pltpu.roll(x, 1, axis=1))
    m = jnp.maximum(m, pltpu.roll(m, 2, axis=1))
    m = jnp.maximum(m, pltpu.roll(m, 4, axis=1))
    # inf/NaN safety: zero every lane that does not hold a group result so
    # 0*inf / stray NaNs in non-selected lanes cannot leak through the matmul.
    lane = jax.lax.broadcasted_iota(jnp.int32, (1, _LANES), 1)
    keep = (lane % _GROUP) == result_lane_offset
    mm = jnp.where(keep, m, jnp.zeros((), m.dtype)).astype(sel_ref.dtype)
    # Compact the 16 per-row group maxima into dense columns with a 0/1
    # selection matmul on the otherwise-idle MXU (32 flop/element).
    y = jnp.dot(mm, sel_ref[...], preferred_element_type=jnp.float32)
    o_ref[...] = y.astype(o_ref.dtype)


def _hp_gather_pool_kernel(win_ref, out_ref):
    # win_ref: (TB, 8, M) -- 8 window taps on the middle axis, M on lanes.
    out_ref[...] = jnp.max(win_ref[...], axis=1, keepdims=True)


# ------------------------------------ wrappers --------------------------------
def _pick_tile_rows(total_rows, itemsize, budget_bytes=(4 << 20)):
    """Largest dtype-aligned divisor of total_rows within a ~4 MiB input-tile
    budget; prefers an even / >=2 grid-step count so both v7x TCs get work."""
    sub = max(8, 32 // max(1, itemsize))          # 8 f32, 16 bf16, 32 int8/fp8
    target = min(total_rows, max(sub, budget_bytes // (_LANES * itemsize)))
    cands = [t for t in range(sub, target + 1, sub) if total_rows % t == 0]
    if not cands:
        return total_rows                          # full array as one (legal) block
    best = max(cands)
    even = [t for t in cands if (total_rows // t) % 2 == 0]
    if even:
        best_even = max(even)
        if 2 * best_even >= best:                  # <=2x tile shrink for evenness
            return best_even
    if total_rows // best < 2:
        multi = [t for t in cands if total_rows // t >= 2]
        if multi:
            best_multi = max(multi)
            if 2 * best_multi >= best:
                return best_multi
    return best


def _build_sel(result_lane_offset, dtype):
    sel = np.zeros((_LANES, _GPR), dtype=np.float32)
    for c in range(_GPR):
        sel[_GROUP * c + result_lane_offset, c] = 1.0
    return jnp.asarray(sel, dtype=dtype)


def _hp_forward_grouped(x, W, perm, result_lane_offset):
    B, C, H, _ = x.shape
    N = W ** 3
    M = N // _GROUP
    R = B * C
    rows = R * N // _LANES
    itemsize = x.dtype.itemsize

    # Free reshape of the contiguous NCHW data into 128-lane rows.
    seq2d = x.reshape(rows, _LANES)

    T = _pick_tile_rows(rows, itemsize)
    grid = (rows // T,)

    # bf16 feeds the MXU natively (exact for a 0/1 selection); f32 stays f32.
    mat_dtype = x.dtype if x.dtype in (jnp.float32, jnp.bfloat16) else jnp.float32
    sel = _build_sel(int(result_lane_offset), mat_dtype)

    kernel = functools.partial(_hp_pool_kernel,
                               result_lane_offset=int(result_lane_offset))

    out2d = pl.pallas_call(
        kernel,
        out_shape=jax.ShapeDtypeStruct((rows, _GPR), x.dtype),
        grid=grid,
        in_specs=[
            # Selection matrix: constant block index -> stays resident in VMEM.
            pl.BlockSpec((_LANES, _GPR), lambda i: (0, 0)),
            pl.BlockSpec((T, _LANES), lambda i: (i, 0)),
        ],
        out_specs=pl.BlockSpec((T, _GPR), lambda i: (i, 0)),
        compiler_params=pltpu.CompilerParams(
            dimension_semantics=("parallel",),
            vmem_limit_bytes=32 * 1024 * 1024),
        cost_estimate=pl.CostEstimate(
            flops=rows * _LANES * (4 + 2 * _GPR),
            transcendentals=0,
            bytes_accessed=rows * (_LANES + _GPR) * itemsize),
    )(sel, seq2d)

    out_seq = out2d.reshape(R, M)
    if perm is not None:
        # TODO(synk): tiny (M-element) output permutation, only needed if the
        # fine curve's coarse-cell visiting order ever differs from `coordinate`
        # (never the case for genuine Hilbert tables); folding it into the
        # output index_map would need block-structured perms.
        out_seq = jnp.take(out_seq, jnp.asarray(perm), axis=1)
    return out_seq.reshape(B, C, (W // 2) ** 2, W // 2)


def _hp_forward_gather(x, W, gather_idx):
    # Fallback for non-self-similar Hilbert tables.
    # TODO(synk): replace the XLA jnp.take with a scalar-prefetched in-kernel
    # gather so the (B*C, 8, M) windows tensor never hits HBM.
    B, C, H, _ = x.shape
    N = W ** 3
    M = N // _GROUP
    R = B * C
    itemsize = x.dtype.itemsize
    seq = x.reshape(R, N)
    win = jnp.take(seq, jnp.asarray(gather_idx), axis=1)      # (R, 8, M)

    # Block several (b,c) rows per grid step to amortize per-step overhead.
    budget = max(1, (2 << 20) // (_GROUP * M * itemsize))
    TB = 1
    for t in range(min(R, budget), 0, -1):
        if R % t == 0:
            TB = t
            break

    pooled = pl.pallas_call(
        _hp_gather_pool_kernel,
        out_shape=jax.ShapeDtypeStruct((R, 1, M), x.dtype),
        grid=(R // TB,),
        in_specs=[pl.BlockSpec((TB, _GROUP, M), lambda i: (i, 0, 0))],
        out_specs=pl.BlockSpec((TB, 1, M), lambda i: (i, 0, 0)),
        compiler_params=pltpu.CompilerParams(dimension_semantics=("parallel",)),
    )(win)
    return pooled.reshape(B, C, (W // 2) ** 2, W // 2)


def hp_forward(x, W, plan):
    """x: (B, C, H, W) with H == W*W.  Returns (B, C, (W//2)**2, W//2)."""
    B, C, H, W_in = x.shape
    assert W_in == W and H == W * W, "HP requires H == W*W"
    if plan["mode"] == "grouped" and (W ** 3) % _LANES == 0:
        return _hp_forward_grouped(x, W, plan["perm"], plan["offset"])
    return _hp_forward_gather(x, W, plan["gather_idx"])


# ------------------------------------ reference + main -----------------------
def hp_reference(x_np, distance, coordinate, W):
    B, C, H, _ = x_np.shape
    seq = x_np.reshape(B, C, -1)
    vol = seq[:, :, distance.reshape(-1)].reshape(B, C, W, W, W)
    pooled = vol.reshape(B, C, W // 2, 2, W // 2, 2, W // 2, 2).max(axis=(3, 5, 7))
    out_seq = pooled[:, :, coordinate[:, 0], coordinate[:, 1], coordinate[:, 2]]
    return out_seq.reshape(B, C, (W // 2) ** 2, W // 2)


if __name__ == "__main__":
    B, C, W = 2, 4, 8          # H = W*W = 64, so x: (2, 4, 64, 8)
    H = W * W

    order_big = int(np.log2(W))
    order_small = order_big - 1

    # Deterministic "parameters" of the module (__init__ args).
    distance = hilbert_distances(order_big)           # (W, W, W) int32
    coordinate = hilbert_coordinates(order_small)     # ((W/2)**3, 3) int32
    plan = build_pool_plan(distance, coordinate, W)

    key = jax.random.PRNGKey(0)
    x = jax.random.normal(key, (B, C, H, W), dtype=jnp.float32)

    out = hp_forward(x, W, plan)
    out = jax.block_until_ready(out)

    expected = hp_reference(np.asarray(x), distance, coordinate, W)
    np.testing.assert_allclose(np.asarray(out), expected, rtol=1e-6, atol=1e-6)
    assert out.shape == (B, C, (W // 2) ** 2, W // 2)

    print("KERNEL_OK")
</pallas_src>

<mosaic_0001>
module attributes {stable_mosaic.version = 11 : i64} {
  func.func @probe_kernel(%arg0: memref<1x128xf32, #tpu.memory_space<vmem>>, %arg1: memref<1x128xf32, #tpu.memory_space<vmem>>) attributes {dimension_semantics = [], scalar_prefetch = 0 : i64, scratch_operands = 0 : i64, tpu.core_type = #tpu.core_type<tc>} {
    %c0 = arith.constant 0 : index
    %c0_0 = arith.constant 0 : index
    %0 = vector.load %arg0[%c0, %c0_0] : memref<1x128xf32, #tpu.memory_space<vmem>>, vector<1x128xf32>
    %c1_i32 = arith.constant 1 : i32
    %1 = tpu.dynamic_rotate %0 by %c1_i32 dim 1 : vector<1x128xf32>, i32 -> vector<1x128xf32>
    %c0_1 = arith.constant 0 : index
    %c0_2 = arith.constant 0 : index
    %2 = vector.load %arg1[%c0_1, %c0_2] : memref<1x128xf32, #tpu.memory_space<vmem>>, vector<1x128xf32>
    tpu.vector_store %arg1[%c0_1, %c0_2], %1 {strides = array<i32>} : memref<1x128xf32, #tpu.memory_space<vmem>>, vector<1x128xf32>,
    return
  }
}

</mosaic_0001>

<llo_original>
// kernel: tpu_custom_call.1
$region0: #{tpu_custom_call.1}
  #allocation0 [shape = 'u32[]', space=smem, size = 0x4, offset = 0x4, fixed_abs, tag = 'smem constant byte address 0x4 - core index']
  #allocation1 [shape = 'u32[144,128]{1,0:T(1,128)}', space=vmem, size = 0x12000, scoped, tag = 'internal scratch']
  %s0 = inlined_call_operand.hbm [shape: f32[1,128], index: 0, kind: input, shape index: {}]
  %s1 = inlined_call_operand.hbm [shape: f32[1,128], index: 1, kind: output, shape index: {}]
  %s2 = sld [smem:[#allocation0]]
  $region18: #{tpu_custom_call.1} parent=0
    _
  %s4 = ssub.s32 1, %s2
  %s5 = scalar_select 0, %s4, %s2
  $region1: #{tpu_custom_call.1} parent=0
    #allocation2 [shape = 'u8[512]{0}', space=vmem, size = 0x400, scoped, tag = 'input window, operand 0, single buffered']
    #allocation3 [shape = 's32[1]{0}', space=sflag, size = 0x4, scoped, tag = 'scoped memory for tpu_custom_call.1']
    #allocation4 [shape = 's32[1]{0}', space=sflag, size = 0x4, scoped, tag = 'scoped memory for tpu_custom_call.1']
    #allocation5 [shape = 'u8[512]{0}', space=vmem, size = 0x400, scoped, tag = 'output window, operand 0, single buffered']
    %6 = vsyncpa [#allocation3], 0
    %7 = vsyncpa [#allocation4], 0
    // Predicated region
    $region2: #{tpu_custom_call.1} parent=1 // pred_check
      _
    $region3: #{tpu_custom_call.1} parent=1 // pred_check_branch
      %9 = sbr.rel (0) target = $region5
    $region4: #{tpu_custom_call.1} parent=1 // pred_region
      %s11 = ssub.s32 16, 16
      %12 = vsyncadd [#allocation3], %s11
      %s14 = sshll.u32 [#allocation2], 4
      %s15 = int_to_ptr.vmem [resolvable:$true] %s14
      %17 = dma.hbm_to_vmem [thread:$0]  %s0, 16, %s15, [#allocation3]
    $region5: #{tpu_custom_call.1} parent=1 // pred_fallthru
      _
    // Predicated region
    $region6: #{tpu_custom_call.1} parent=1 // pred_check
      _
    $region7: #{tpu_custom_call.1} parent=1 // pred_check_branch
      %19 = sbr.rel (0) target = $region9
    $region8: #{tpu_custom_call.1} parent=1 // pred_region
      %20 = dma.done [#allocation3], 16
    $region9: #{tpu_custom_call.1} parent=1 // pred_fallthru
      _
    %v21 = vld [vmem:[#allocation2] sm:$0x1]
    %22 = vrot.lane.b32.xlu0 %v21, 1
    %v23 = vpop.permute.xlu0 %22
    %24 = vst [vmem:[#allocation5] sm:$0x1] %v23
    // Predicated region
    $region10: #{tpu_custom_call.1} parent=1 // pred_check
      _
    $region11: #{tpu_custom_call.1} parent=1 // pred_check_branch
      %26 = sbr.rel (0) target = $region13
    $region12: #{tpu_custom_call.1} parent=1 // pred_region
      %s28 = ssub.s32 16, 16
      %29 = vsyncadd [#allocation4], %s28
      %s31 = sshll.u32 [#allocation5], 4
      %s32 = int_to_ptr.vmem [resolvable:$true] %s31
      %34 = dma.vmem_to_hbm [thread:$0]  %s32, 16, %s1, [#allocation4]
    $region13: #{tpu_custom_call.1} parent=1 // pred_fallthru
      _
    // Predicated region
    $region14: #{tpu_custom_call.1} parent=1 // pred_check
      _
    $region15: #{tpu_custom_call.1} parent=1 // pred_check_branch
      %36 = sbr.rel (0) target = $region17
    $region16: #{tpu_custom_call.1} parent=1 // pred_region
      %37 = dma.done [#allocation4], 16
    $region17: #{tpu_custom_call.1} parent=1 // pred_fallthru
      _
    %38 = vsyncpa [#allocation3], 1
    %39 = vsyncpa [#allocation4], 1

</llo_original>
